<compile_context>
chip_gen: v7x
topology: tpu7x:2x2x1
jax: 0.10.0
libtpu: 0.0.40
codegen_flags: <defaults>
</compile_context>

<pallas_src>
import functools
import math

import jax
import jax.numpy as jnp
from jax.experimental import pallas as pl
from jax.experimental.pallas import tpu as pltpu


VMEM_LIMIT = 64 * 1024 * 1024  # budget for v7x (64 MiB physical VMEM)


def _fit(dim, target):
    """Tile size: `target` if it evenly divides `dim`, else the full dim."""
    if dim <= target or dim % target == 0:
        return min(dim, target)
    return dim


# --------------------------- tiled matmul kernel ---------------------------- #

def _matmul_kernel(x_ref, w_ref, o_ref, acc_ref):
    @pl.when(pl.program_id(2) == 0)
    def _():
        acc_ref[...] = jnp.zeros_like(acc_ref)

    acc_ref[...] += jnp.dot(
        x_ref[...], w_ref[...], preferred_element_type=jnp.float32
    )

    @pl.when(pl.program_id(2) == pl.num_programs(2) - 1)
    def _():
        o_ref[...] = acc_ref[...].astype(o_ref.dtype)


def pallas_matmul(x, wt, *, tm=256, tn=256, tk=512):
    """y = x @ wt ; wt is already [in, out] (pre-transposed nn.Linear weight)."""
    M, K = x.shape
    _, N = wt.shape
    tm, tn, tk = _fit(M, tm), _fit(N, tn), _fit(K, tk)
    grid = (M // tm, N // tn, K // tk)
    return pl.pallas_call(
        _matmul_kernel,
        out_shape=jax.ShapeDtypeStruct((M, N), x.dtype),
        grid=grid,
        in_specs=[
            pl.BlockSpec((tm, tk), lambda i, j, k: (i, k)),
            pl.BlockSpec((tk, tn), lambda i, j, k: (k, j)),
        ],
        out_specs=pl.BlockSpec((tm, tn), lambda i, j, k: (i, j)),
        scratch_shapes=[pltpu.VMEM((tm, tn), jnp.float32)],
        compiler_params=pltpu.CompilerParams(
            dimension_semantics=("parallel", "parallel", "arbitrary"),
            vmem_limit_bytes=VMEM_LIMIT,
        ),
    )(x, wt)


# ------------------------------ RMSNorm kernel ------------------------------ #

def _rmsnorm_kernel(x_ref, w_ref, o_ref, *, eps):
    x = x_ref[...].astype(jnp.float32)
    ms = jnp.mean(x * x, axis=-1, keepdims=True)
    y = (x * jax.lax.rsqrt(ms + eps)) * w_ref[...].astype(jnp.float32)
    o_ref[...] = y.astype(o_ref.dtype)


def pallas_rmsnorm(x2d, w, eps, *, tm=512):
    M, D = x2d.shape
    tm = _fit(M, tm)
    kern = functools.partial(_rmsnorm_kernel, eps=eps)
    return pl.pallas_call(
        kern,
        out_shape=jax.ShapeDtypeStruct((M, D), x2d.dtype),
        grid=(M // tm,),
        in_specs=[
            pl.BlockSpec((tm, D), lambda i: (i, 0)),
            pl.BlockSpec((1, D), lambda i: (0, 0)),   # weight stays resident
        ],
        out_specs=pl.BlockSpec((tm, D), lambda i: (i, 0)),
        compiler_params=pltpu.CompilerParams(
            dimension_semantics=("parallel",),
            vmem_limit_bytes=VMEM_LIMIT,
        ),
    )(x2d, w.reshape(1, D))


# ----------------------- flash-style GQA attention kernel ------------------- #

def _attn_kernel(q_ref, k_ref, v_ref, o_ref, m_sc, l_sc, acc_sc,
                 *, scale, start_pos, ts):
    s_idx = pl.program_id(2)

    @pl.when(s_idx == 0)
    def _():
        m_sc[...] = jnp.full_like(m_sc, -jnp.inf)
        l_sc[...] = jnp.zeros_like(l_sc)
        acc_sc[...] = jnp.zeros_like(acc_sc)

    q = q_ref[...]           # (n_rep, L, hd)  - all query heads of this KV group
    k = k_ref[...]           # (ts, hd)
    v = v_ref[...]           # (ts, hd)
    L = q.shape[1]

    # scores: (n_rep, L, ts)
    s = jnp.einsum("hqd,kd->hqk", q, k,
                   preferred_element_type=jnp.float32) * scale

    # causal mask computed in-kernel (finite large-negative to avoid 0/0 NaNs)
    q_pos = start_pos + jax.lax.broadcasted_iota(jnp.int32, (L, ts), 0)
    k_pos = s_idx * ts + jax.lax.broadcasted_iota(jnp.int32, (L, ts), 1)
    s = jnp.where((k_pos <= q_pos)[None, :, :], s, -1e30)

    m_prev = m_sc[...]
    m_new = jnp.maximum(m_prev, jnp.max(s, axis=-1, keepdims=True))
    alpha = jnp.exp(m_prev - m_new)
    p = jnp.exp(s - m_new)
    l_sc[...] = alpha * l_sc[...] + jnp.sum(p, axis=-1, keepdims=True)
    acc_sc[...] = alpha * acc_sc[...] + jnp.einsum(
        "hqk,kd->hqd", p.astype(v.dtype), v,
        preferred_element_type=jnp.float32)
    m_sc[...] = m_new

    @pl.when(s_idx == pl.num_programs(2) - 1)
    def _():
        inv_l = pl.reciprocal(l_sc[...], approx=True)
        o_ref[...] = (acc_sc[...] * inv_l).astype(o_ref.dtype)


def pallas_attention(q, k, v, scale, start_pos, *, ts=512):
    """q: (B, KV, n_rep, L, hd)   k, v: (B, KV, S, hd)."""
    B, KV, n_rep, L, hd = q.shape
    S = k.shape[2]
    ts = _fit(S, ts)
    kern = functools.partial(_attn_kernel, scale=scale,
                             start_pos=start_pos, ts=ts)
    return pl.pallas_call(
        kern,
        out_shape=jax.ShapeDtypeStruct((B, KV, n_rep, L, hd), q.dtype),
        grid=(B, KV, S // ts),
        in_specs=[
            pl.BlockSpec((None, None, n_rep, L, hd),
                         lambda b, g, s: (b, g, 0, 0, 0)),
            pl.BlockSpec((None, None, ts, hd), lambda b, g, s: (b, g, s, 0)),
            pl.BlockSpec((None, None, ts, hd), lambda b, g, s: (b, g, s, 0)),
        ],
        out_specs=pl.BlockSpec((None, None, n_rep, L, hd),
                               lambda b, g, s: (b, g, 0, 0, 0)),
        scratch_shapes=[
            pltpu.VMEM((n_rep, L, 1), jnp.float32),   # running max
            pltpu.VMEM((n_rep, L, 1), jnp.float32),   # running denom
            pltpu.VMEM((n_rep, L, hd), jnp.float32),  # output accumulator
        ],
        compiler_params=pltpu.CompilerParams(
            dimension_semantics=("parallel", "parallel", "arbitrary"),
            vmem_limit_bytes=VMEM_LIMIT,
        ),
    )(q, k, v)


# --------------------------- fused SwiGLU FFN kernel ------------------------ #

def _ffn_kernel(x_ref, w1_ref, w3_ref, w2_ref, o_ref, acc_ref):
    j = pl.program_id(1)

    @pl.when(j == 0)
    def _():
        acc_ref[...] = jnp.zeros_like(acc_ref)

    x = x_ref[...]
    h1 = jnp.dot(x, w1_ref[...], preferred_element_type=jnp.float32)
    h3 = jnp.dot(x, w3_ref[...], preferred_element_type=jnp.float32)
    g = (h1 * jax.nn.sigmoid(h1)) * h3
    acc_ref[...] += jnp.dot(g.astype(w2_ref.dtype), w2_ref[...],
                            preferred_element_type=jnp.float32)

    @pl.when(j == pl.num_programs(1) - 1)
    def _():
        o_ref[...] = acc_ref[...].astype(o_ref.dtype)


def pallas_ffn(x2d, w1t, w3t, w2t, *, tm=256, th=256):
    """w2( silu(x @ w1t) * (x @ w3t) ); weights pre-transposed to [in, out]."""
    M, D = x2d.shape
    Hf = w1t.shape[1]
    tm, th = _fit(M, tm), _fit(Hf, th)
    return pl.pallas_call(
        _ffn_kernel,
        out_shape=jax.ShapeDtypeStruct((M, D), x2d.dtype),
        grid=(M // tm, Hf // th),
        in_specs=[
            pl.BlockSpec((tm, D), lambda i, j: (i, 0)),
            pl.BlockSpec((D, th), lambda i, j: (0, j)),
            pl.BlockSpec((D, th), lambda i, j: (0, j)),
            pl.BlockSpec((th, D), lambda i, j: (j, 0)),
        ],
        out_specs=pl.BlockSpec((tm, D), lambda i, j: (i, 0)),
        scratch_shapes=[pltpu.VMEM((tm, D), jnp.float32)],
        compiler_params=pltpu.CompilerParams(
            dimension_semantics=("parallel", "arbitrary"),
            vmem_limit_bytes=VMEM_LIMIT,
        ),
    )(x2d, w1t, w3t, w2t)


# --------------------- in-place (aliased) KV-cache update ------------------- #

def _cache_update_kernel(new_ref, cache_ref, out_ref, sem, *, start_pos):
    # out_ref is aliased with cache_ref (same HBM buffer); DMA the new K/V
    # slab into the [0:B, start_pos:start_pos+L] window.
    B, L = new_ref.shape[0], new_ref.shape[1]
    cp = pltpu.make_async_copy(
        new_ref, out_ref.at[pl.ds(0, B), pl.ds(start_pos, L)], sem)
    cp.start()
    cp.wait()


def pallas_cache_update(cache, new, start_pos):
    """cache[:B, start_pos:start_pos+L] = new   (in place via aliasing)."""
    kern = functools.partial(_cache_update_kernel, start_pos=start_pos)
    return pl.pallas_call(
        kern,
        out_shape=jax.ShapeDtypeStruct(cache.shape, cache.dtype),
        in_specs=[
            pl.BlockSpec(memory_space=pl.ANY),   # new K/V slab (HBM)
            pl.BlockSpec(memory_space=pl.ANY),   # cache (aliased with output)
        ],
        out_specs=pl.BlockSpec(memory_space=pl.ANY),
        scratch_shapes=[pltpu.SemaphoreType.DMA],
        input_output_aliases={1: 0},
        compiler_params=pltpu.CompilerParams(has_side_effects=True),
    )(new, cache)


# ------------------------------- Model glue -------------------------------- #

def precompute_freqs_cis(dim, end, theta):
    freqs = 1.0 / (
        theta ** (jnp.arange(0, dim, 2, dtype=jnp.float32)[: dim // 2] / dim)
    )
    t = jnp.arange(end, dtype=jnp.float32)
    freqs = jnp.outer(t, freqs)  # (end, dim/2)
    return jnp.cos(freqs), jnp.sin(freqs)


def apply_rotary_emb(x, cos, sin):
    # x: (B, L, n_heads, d) ; cos/sin: (L, d/2)
    B, L, H, d = x.shape
    xr = x.reshape(B, L, H, d // 2, 2)
    x_even, x_odd = xr[..., 0], xr[..., 1]
    c = cos[None, :, None, :]
    s = sin[None, :, None, :]
    o_even = x_even * c - x_odd * s
    o_odd = x_even * s + x_odd * c
    return jnp.stack([o_even, o_odd], axis=-1).reshape(B, L, H, d).astype(x.dtype)


def block_forward(lp, kv_cache, x, start_pos, cos, sin, cfg):
    B, L, D = x.shape
    H, KV, hd = cfg["num_heads"], cfg["num_kv_heads"], cfg["head_dim"]
    n_rep = H // KV
    eps = cfg["eps"]

    x2 = x.reshape(B * L, D)
    xn = pallas_rmsnorm(x2, lp["attn_norm_w"], eps)

    xq = pallas_matmul(xn, lp["wq_t"]).reshape(B, L, H, hd)
    xk = pallas_matmul(xn, lp["wk_t"]).reshape(B, L, KV, hd)
    xv = pallas_matmul(xn, lp["wv_t"]).reshape(B, L, KV, hd)

    xq = apply_rotary_emb(xq, cos, sin)
    xk = apply_rotary_emb(xk, cos, sin)

    # In-place (aliased) KV-cache update; updated cache threaded back out.
    cache_k, cache_v = kv_cache
    cache_k = pallas_cache_update(cache_k, xk, start_pos)
    cache_v = pallas_cache_update(cache_v, xv, start_pos)

    S = start_pos + L
    keys = cache_k[:B, :S]          # (B, S, KV, hd)
    values = cache_v[:B, :S]

    # GQA without jnp.repeat: pack the n_rep query heads of each KV group.
    q = jnp.transpose(xq.reshape(B, L, KV, n_rep, hd), (0, 2, 3, 1, 4))
    k = jnp.transpose(keys, (0, 2, 1, 3))      # (B, KV, S, hd)
    v = jnp.transpose(values, (0, 2, 1, 3))    # (B, KV, S, hd)

    ctx = pallas_attention(q, k, v, 1.0 / math.sqrt(hd), start_pos)
    ctx = jnp.transpose(ctx, (0, 3, 1, 2, 4)).reshape(B * L, H * hd)
    attn_out = pallas_matmul(ctx, lp["wo_t"]).reshape(B, L, D)

    h = x + attn_out
    hn = pallas_rmsnorm(h.reshape(B * L, D), lp["ffn_norm_w"], eps)
    ffn = pallas_ffn(hn, lp["w1_t"], lp["w3_t"], lp["w2_t"]).reshape(B, L, D)
    return h + ffn, (cache_k, cache_v)


def reasoner_forward(params, kv_caches, tokens, start_pos, cfg):
    B, L = tokens.shape
    D = cfg["hidden_dim"]
    dtype = cfg["dtype"]

    h = params["tok_emb"][tokens].astype(dtype)   # embedding gather (glue)

    cos = params["freqs_cos"][start_pos: start_pos + L]
    sin = params["freqs_sin"][start_pos: start_pos + L]

    new_caches = []
    for lp, kv in zip(params["layers"], kv_caches):
        h, kv = block_forward(lp, kv, h, start_pos, cos, sin, cfg)
        new_caches.append(kv)

    hn = pallas_rmsnorm(h.reshape(B * L, D), params["norm_w"], cfg["eps"])
    text_stream = (
        pallas_matmul(hn, params["text_out_wt"]).reshape(B, L, -1)
        .astype(jnp.float32)
    )
    audio_stream = pallas_matmul(hn, params["audio_out_wt"]).reshape(B, L, -1)
    next_token = jnp.argmax(text_stream[:, -1, :], axis=-1)
    return next_token, text_stream, audio_stream, new_caches


# ----------------------------- Param init ---------------------------------- #

def _ffn_hidden(cfg):
    hidden = int(2 * (4 * cfg["hidden_dim"]) / 3)  # ffn_dim_multiplier is None
    mo = cfg["multiple_of"]
    return mo * ((hidden + mo - 1) // mo)


def init_params(key, cfg):
    D = cfg["hidden_dim"]
    H, KV, hd = cfg["num_heads"], cfg["num_kv_heads"], cfg["head_dim"]
    V, A = cfg["vocab"], cfg["audio_dim"]
    dtype = cfg["dtype"]
    Hf = _ffn_hidden(cfg)

    keys = iter(jax.random.split(key, 8 + 8 * cfg["layers"]))

    def dense_t(shape_out_in):
        # Weights stored pre-transposed ([in, out]) so no call-time transposes.
        out_d, in_d = shape_out_in
        w = 0.02 * jax.random.normal(next(keys), (out_d, in_d), jnp.float32)
        return jnp.asarray(w.T, dtype)

    layers = []
    for _ in range(cfg["layers"]):
        layers.append(
            dict(
                wq_t=dense_t((H * hd, D)),
                wk_t=dense_t((KV * hd, D)),
                wv_t=dense_t((KV * hd, D)),
                wo_t=dense_t((D, H * hd)),
                w1_t=dense_t((Hf, D)),
                w2_t=dense_t((D, Hf)),
                w3_t=dense_t((Hf, D)),
                attn_norm_w=jnp.ones((D,), dtype),
                ffn_norm_w=jnp.ones((D,), dtype),
            )
        )

    cos, sin = precompute_freqs_cis(D // H, cfg["max_pos"] * 2, cfg["rope_theta"])
    return dict(
        tok_emb=0.02 * jax.random.normal(next(keys), (V, D), jnp.float32),
        layers=layers,
        norm_w=jnp.ones((D,), dtype),
        text_out_wt=dense_t((V, D)),
        audio_out_wt=dense_t((A, D)),
        freqs_cos=cos,
        freqs_sin=sin,
    )


def init_kv_caches(cfg):
    KV, hd = cfg["num_kv_heads"], cfg["head_dim"]
    shape = (cfg["max_batch"], cfg["max_pos"], KV, hd)
    return [
        (jnp.zeros(shape, cfg["dtype"]), jnp.zeros(shape, cfg["dtype"]))
        for _ in range(cfg["layers"])
    ]


# --------------------------------- Main ------------------------------------ #

if __name__ == "__main__":
    cfg = dict(
        vocab=64,
        hidden_dim=32,
        num_heads=4,
        num_kv_heads=2,
        head_dim=8,           # = hidden_dim // num_heads
        layers=2,
        max_pos=32,
        max_batch=2,
        multiple_of=8,
        eps=1e-5,
        rope_theta=10000.0,
        audio_dim=16,
        dtype=jnp.float32,    # bf16 supported (f32 accumulation in all kernels)
    )

    key = jax.random.PRNGKey(0)
    params = init_params(key, cfg)
    kv_caches = init_kv_caches(cfg)

    B, L = 2, 8
    tokens = jax.random.randint(jax.random.fold_in(key, 123), (B, L), 0, cfg["vocab"])

    next_token, text_stream, audio_stream, kv_caches = reasoner_forward(
        params, kv_caches, tokens, 0, cfg
    )
    jax.block_until_ready((next_token, text_stream, audio_stream, kv_caches))

    assert next_token.shape == (B,)
    assert text_stream.shape == (B, L, cfg["vocab"])
    assert audio_stream.shape == (B, L, cfg["audio_dim"])
    assert text_stream.dtype == jnp.float32
    assert kv_caches[0][0].shape == (cfg["max_batch"], cfg["max_pos"],
                                     cfg["num_kv_heads"], cfg["head_dim"])

    print("KERNEL_OK")
</pallas_src>

<mosaic_0001>
module attributes {stable_mosaic.version = 11 : i64} {
  func.func @_rmsnorm_kernel(%arg0: i32, %arg1: memref<16x32xf32, #tpu.memory_space<vmem>>, %arg2: memref<1x32xf32, #tpu.memory_space<vmem>>, %arg3: memref<16x32xf32, #tpu.memory_space<vmem>>) attributes {dimension_semantics = [#tpu.dimension_semantics<parallel>], iteration_bounds = array<i64: 1>, scalar_prefetch = 0 : i64, scratch_operands = 0 : i64, tpu.core_type = #tpu.core_type<tc>, window_params = [{transform_indices = @transform_0, window_bounds = array<i64: 16, 32>}, {pipeline_mode = #tpu.pipeline_mode<synchronous>, transform_indices = @transform_1, window_bounds = array<i64: 1, 32>}, {transform_indices = @transform_2, window_bounds = array<i64: 16, 32>}]} {
    %c0 = arith.constant 0 : index
    %c0_0 = arith.constant 0 : index
    %0 = vector.load %arg1[%c0, %c0_0] : memref<16x32xf32, #tpu.memory_space<vmem>>, vector<16x32xf32>
    %1 = arith.mulf %0, %0 : vector<16x32xf32>
    %cst = arith.constant dense<0.000000e+00> : vector<16xf32>
    %2 = vector.multi_reduction <add>, %1, %cst [1] : vector<16x32xf32> to vector<16xf32>
    %3 = vector.shape_cast %2 : vector<16xf32> to vector<16x1xf32>
    %cst_1 = arith.constant 3.200000e+01 : f32
    %4 = vector.broadcast %cst_1 : f32 to vector<16x1xf32>
    %5 = arith.divf %3, %4 : vector<16x1xf32>
    %cst_2 = arith.constant 9.99999974E-6 : f32
    %6 = vector.broadcast %cst_2 : f32 to vector<16x1xf32>
    %7 = arith.addf %5, %6 : vector<16x1xf32>
    %8 = math.rsqrt %7 : vector<16x1xf32>
    %9 = vector.broadcast %8 : vector<16x1xf32> to vector<16x32xf32>
    %10 = arith.mulf %0, %9 : vector<16x32xf32>
    %c0_3 = arith.constant 0 : index
    %c0_4 = arith.constant 0 : index
    %11 = vector.load %arg2[%c0_3, %c0_4] : memref<1x32xf32, #tpu.memory_space<vmem>>, vector<1x32xf32>
    %12 = vector.broadcast %11 : vector<1x32xf32> to vector<16x32xf32>
    %13 = arith.mulf %10, %12 : vector<16x32xf32>
    %c0_5 = arith.constant 0 : index
    %c0_6 = arith.constant 0 : index
    %14 = vector.load %arg3[%c0_5, %c0_6] : memref<16x32xf32, #tpu.memory_space<vmem>>, vector<16x32xf32>
    tpu.vector_store %arg3[%c0_5, %c0_6], %13 {strides = array<i32>} : memref<16x32xf32, #tpu.memory_space<vmem>>, vector<16x32xf32>,
    return
  }
  func.func @transform_0(%arg0: i32) -> (i32, i32) {
    %c0_i32 = arith.constant 0 : i32
    %c0_i32_0 = arith.constant 0 : i32
    return %arg0, %c0_i32 : i32, i32
  }
  func.func @transform_1(%arg0: i32) -> (i32, i32) {
    %c0_i32 = arith.constant 0 : i32
    %c0_i32_0 = arith.constant 0 : i32
    %c0_i32_1 = arith.constant 0 : i32
    return %c0_i32, %c0_i32_0 : i32, i32
  }
  func.func @transform_2(%arg0: i32) -> (i32, i32) {
    %c0_i32 = arith.constant 0 : i32
    %c0_i32_0 = arith.constant 0 : i32
    return %arg0, %c0_i32 : i32, i32
  }
}

</mosaic_0001>

<llo_original>
// kernel: tpu_custom_call.1
$region0: #{tpu_custom_call.1}
  #allocation0 [shape = 'u32[]', space=smem, size = 0x4, offset = 0x4, fixed_abs, tag = 'smem constant byte address 0x4 - core index']
  #allocation1 [shape = 'u32[144,128]{1,0:T(1,128)}', space=vmem, size = 0x12000, scoped, tag = 'internal scratch']
  %s0 = inlined_call_operand.hbm [shape: f32[16,32], index: 0, kind: input, shape index: {}]
  %s1 = inlined_call_operand.hbm [shape: f32[1,32], index: 1, kind: input, shape index: {}]
  %s2 = inlined_call_operand.hbm [shape: f32[16,32], index: 2, kind: output, shape index: {}]
  %s3 = sld [smem:[#allocation0]]
  $region26: #{tpu_custom_call.1} parent=0
    _
  %s5 = ssub.s32 1, %s3
  %s6 = scalar_select 0, %s5, %s3
  $region1: #{tpu_custom_call.1} parent=0
    #allocation2 [shape = 'u8[8192]{0}', space=vmem, size = 0x2000, scoped, tag = 'input window, operand 0, single buffered']
    #allocation3 [shape = 's32[1]{0}', space=sflag, size = 0x4, scoped, tag = 'scoped memory for tpu_custom_call.1']
    #allocation4 [shape = 's32[1]{0}', space=sflag, size = 0x4, scoped, tag = 'scoped memory for tpu_custom_call.1']
    #allocation5 [shape = 'u8[512]{0}', space=vmem, size = 0x400, scoped, tag = 'input window, operand 1, single buffered']
    #allocation6 [shape = 's32[1]{0}', space=sflag, size = 0x4, scoped, tag = 'scoped memory for tpu_custom_call.1']
    #allocation7 [shape = 'u8[8192]{0}', space=vmem, size = 0x2000, scoped, tag = 'output window, operand 0, single buffered']
    %7 = vsyncpa [#allocation3], 0
    %8 = vsyncpa [#allocation6], 0
    %9 = vsyncpa [#allocation4], 0
    // Predicated region
    $region2: #{tpu_custom_call.1} parent=1 // pred_check
      _
    $region3: #{tpu_custom_call.1} parent=1 // pred_check_branch
      %11 = sbr.rel (0) target = $region5
    $region4: #{tpu_custom_call.1} parent=1 // pred_region
      %s13 = ssub.s32 256, 256
      %14 = vsyncadd [#allocation3], %s13
      %s15 = sshll.u32 [#allocation2], 4
      %s16 = int_to_ptr.vmem [resolvable:$true] %s15
      %21 = dma.hbm_to_vmem [thread:$0]  %s0, 256, %s16, [#allocation3], 128, 128, 8
    $region5: #{tpu_custom_call.1} parent=1 // pred_fallthru
      _
    // Predicated region
    $region6: #{tpu_custom_call.1} parent=1 // pred_check
      _
    $region7: #{tpu_custom_call.1} parent=1 // pred_check_branch
      %23 = sbr.rel (0) target = $region9
    $region8: #{tpu_custom_call.1} parent=1 // pred_region
      %s25 = ssub.s32 16, 16
      %26 = vsyncadd [#allocation6], %s25
      %s28 = sshll.u32 [#allocation5], 4
      %s29 = int_to_ptr.vmem [resolvable:$true] %s28
      %31 = dma.hbm_to_vmem [thread:$0]  %s1, 16, %s29, [#allocation6]
    $region9: #{tpu_custom_call.1} parent=1 // pred_fallthru
      _
    // Predicated region
    $region10: #{tpu_custom_call.1} parent=1 // pred_check
      _
    $region11: #{tpu_custom_call.1} parent=1 // pred_check_branch
      %33 = sbr.rel (0) target = $region13
    $region12: #{tpu_custom_call.1} parent=1 // pred_region
      %34 = dma.done [#allocation3], 256
    $region13: #{tpu_custom_call.1} parent=1 // pred_fallthru
      _
    // Predicated region
    $region14: #{tpu_custom_call.1} parent=1 // pred_check
      _
    $region15: #{tpu_custom_call.1} parent=1 // pred_check_branch
      %36 = sbr.rel (0) target = $region17
    $region16: #{tpu_custom_call.1} parent=1 // pred_region
      %37 = dma.done [#allocation6], 16
    $region17: #{tpu_custom_call.1} parent=1 // pred_fallthru
      _
    %v38 = vld [vmem:[#allocation2] sm:$0xff]
    %v39 = vld [vmem:[#allocation2 + $0x8] sm:$0xff]
    %v40 = vmul.f32 %v38, %v38
    %v41 = vmul.f32 %v39, %v39
    %vm42 = vcmask 261120
    %v43 = vsel %vm42, %v40, 0.0
    %44 = vadd.xlane.f32.xlu0 %v43
    %v45 = vpop.xlane.xlu0 %44
    %v46 = vsel %vm42, %v41, 0.0
    %47 = vadd.xlane.f32.xlu0 %v46
    %v48 = vpop.xlane.xlu0 %47
    %v49 = vrcp.pop 32.0
    %v50 = vmul.f32 %v45, %v49
    %v51 = vmul.f32 %v48, %v49
    %v52 = vadd.f32 %v50, 1e-05
    %v53 = vadd.f32 %v51, 1e-05
    %v54 = vrsqrt.pop %v52
    %v55 = vrsqrt.pop %v53
    %v56 = vmul.f32 %v38, %v54
    %v57 = vmul.f32 %v39, %v55
    %v58 = vld [vmem:[#allocation5] sm:$0x1]
    %v60 = vlaneseq
    %v61 = vshrl.u32 %v60, 7
    %v62 = vsub.s32 0, %v61
    %v63 = vrot.slane %v58, %v62
    %v65 = vmul.f32 %v56, %v63
    %v66 = vmul.f32 %v57, %v63
    %67 = vst.msk [vmem:[#allocation7] sm:$0xff] %vm42, %v65
    %68 = vst.msk [vmem:[#allocation7 + $0x8] sm:$0xff] %vm42, %v66
    // Predicated region
    $region18: #{tpu_custom_call.1} parent=1 // pred_check
      _
    $region19: #{tpu_custom_call.1} parent=1 // pred_check_branch
      %70 = sbr.rel (0) target = $region21
    $region20: #{tpu_custom_call.1} parent=1 // pred_region
      %s72 = ssub.s32 256, 256
      %73 = vsyncadd [#allocation4], %s72
      %s74 = sshll.u32 [#allocation7], 4
      %s75 = int_to_ptr.vmem [resolvable:$true] %s74
      %80 = dma.vmem_to_hbm [thread:$0]  %s75, 256, %s2, [#allocation4], 128, 128, 8
    $region21: #{tpu_custom_call.1} parent=1 // pred_fallthru
      _
    // Predicated region
    $region22: #{tpu_custom_call.1} parent=1 // pred_check
      _
    $region23: #{tpu_custom_call.1} parent=1 // pred_check_branch
      %82 = sbr.rel (0) target = $region25
    $region24: #{tpu_custom_call.1} parent=1 // pred_region
      %83 = dma.done [#allocation4], 256
    $region25: #{tpu_custom_call.1} parent=1 // pred_fallthru
      _
    %84 = vsyncpa [#allocation3], 1
    %85 = vsyncpa [#allocation6], 1
    %86 = vsyncpa [#allocation4], 1

</llo_original>
